<compile_context>
chip_gen: v5e
topology: v5e:2x2
jax: 0.10.0
libtpu: 0.0.40
codegen_flags: <defaults>
</compile_context>

<pallas_src>
import jax
import jax.numpy as jnp
from jax.experimental import pallas as pl
from jax.experimental.pallas import tpu as pltpu


# Lane-dense slab: flatten edge_attr and view it as (rows, _LANE_W).
# _LANE_W is a multiple of 128 -> full, unmasked vector stores on full blocks.
_LANE_W = 512

# Max tile = 2048 * 512 * 4 B = 4 MiB (f32).  Default double-buffering on the
# input and output => 16 MiB VMEM, safe on every generation once the scoped
# VMEM limit is raised to 32 MiB (v5e default is only 16 MiB).
_MAX_TILE_ROWS = 2048
_VMEM_LIMIT_BYTES = 32 * 1024 * 1024

# Aim for at least this many grid steps so DMA/compute pipelining and the
# v7x 2-TensorCore megacore split actually engage on medium-sized inputs.
_MIN_GRID_STEPS = 4

# Below ~1 MiB of data the pallas custom-call launch + plumbing costs more
# than the fused XLA add it replaces.
_SMALL_THRESHOLD = 256 * 1024  # elements (1 MiB of f32)


def _shift_kernel(p_ref, e_ref, o_ref):
    """o = e + p.  p lives in SMEM (one scalar), broadcast on the VPU."""
    o_ref[...] = e_ref[...] + p_ref[0]


def _round_up(v, m):
    return -(-v // m) * m


def _pick_tile_rows(rows):
    """Largest tile <= 4 MiB that still leaves >= _MIN_GRID_STEPS grid steps."""
    target = max(8, -(-rows // _MIN_GRID_STEPS))   # cdiv(rows, MIN_GRID_STEPS)
    target = _round_up(target, 8)                  # sublane multiple
    return min(_MAX_TILE_ROWS, target)


def _shift_slab(mat, p_arr, tile_rows):
    """Row-tiled, double-buffered shift over a (rows, _LANE_W) slab."""
    rows, _ = mat.shape
    grid = (pl.cdiv(rows, tile_rows),)   # partial last row-block is masked
    return pl.pallas_call(
        _shift_kernel,
        out_shape=jax.ShapeDtypeStruct(mat.shape, mat.dtype),
        grid=grid,
        in_specs=[
            pl.BlockSpec(memory_space=pltpu.MemorySpace.SMEM),     # p scalar
            pl.BlockSpec((tile_rows, _LANE_W), lambda i: (i, 0)),  # data
        ],
        out_specs=pl.BlockSpec((tile_rows, _LANE_W), lambda i: (i, 0)),
        compiler_params=pltpu.CompilerParams(
            # Row-tile axis is independent -> shard the loop across
            # TensorCores (matters on v7x with 2 TCs per chip).
            dimension_semantics=("parallel",),
            vmem_limit_bytes=_VMEM_LIMIT_BYTES,
        ),
    )(p_arr, mat)


@jax.jit
def _shift_large(edge_attr, p_arr):
    """Pallas path for large edge_attr.  p_arr is a (1,) runtime scalar."""
    shape = edge_attr.shape
    n = edge_attr.size

    flat = edge_attr.reshape(-1)                 # free (contiguous row-major)
    n_head = (n // _LANE_W) * _LANE_W            # lane-aligned prefix
    rows = n_head // _LANE_W
    tile_rows = _pick_tile_rows(rows)            # static (shapes known at trace)

    head = _shift_slab(flat[:n_head].reshape(rows, _LANE_W), p_arr, tile_rows)
    head = head.reshape(-1)

    if n_head == n:
        # Fully aligned: reshape -> pallas -> reshape, no extra HBM passes.
        return head.reshape(shape)

    # Ragged tail (< _LANE_W elements): tiny XLA add, then stitch.  This costs
    # one extra pass over the head (the concat) but avoids padding + slicing
    # the whole array; only non-512-multiple sizes pay it.
    tail = flat[n_head:] + p_arr[0]
    return jnp.concatenate([head, tail]).reshape(shape)


def edge_feat_shift(x, edge_index, edge_attr=None, batch=None, p=0.05):
    """Pallas implementation of EdgeFeatShift.forward.

    Returns (x, edge_index, edge_attr + p, batch, None).
    """
    if edge_attr is None:
        # PyTorch would raise on `None + float`; require a real array.
        raise ValueError("edge_attr must be provided")

    # Mirror PyTorch's type promotion for `int_tensor + float`.
    if not jnp.issubdtype(edge_attr.dtype, jnp.floating):
        edge_attr = edge_attr.astype(jnp.float32)

    if edge_attr.size < _SMALL_THRESHOLD:
        # Small inputs: the fused XLA elementwise add beats a custom-call
        # launch; no Pallas plumbing.
        shifted = edge_attr + jnp.asarray(p, dtype=edge_attr.dtype)
    else:
        # p as a runtime operand -> no recompile for a different shift value.
        p_arr = jnp.full((1,), p, dtype=edge_attr.dtype)
        shifted = _shift_large(edge_attr, p_arr)

    return (x, edge_index, shifted, batch, None)


if __name__ == "__main__":
    key = jax.random.PRNGKey(0)
    k1, k2, k3, k4, k5 = jax.random.split(key, 5)

    num_nodes, node_dim = 8, 16
    num_edges, edge_dim = 12, 4

    x = jax.random.normal(k1, (num_nodes, node_dim), dtype=jnp.float32)
    edge_index = jax.random.randint(k2, (2, num_edges), 0, num_nodes,
                                    dtype=jnp.int32)
    edge_attr = jax.random.normal(k3, (num_edges, edge_dim), dtype=jnp.float32)
    batch = jnp.zeros((num_nodes,), dtype=jnp.int32)

    # 1) Small, module-sized case: takes the plain-XLA fallback path.
    x_o, ei_o, ea_o, b_o, none_o = edge_feat_shift(
        x, edge_index, edge_attr, batch, p=0.05)
    jax.block_until_ready(ea_o)
    assert jnp.allclose(ea_o, edge_attr + 0.05, atol=1e-6)
    assert none_o is None
    assert x_o is x and ei_o is edge_index and b_o is batch

    # 2) Lane-aligned large case: 4096*256 = 1,048,576 elements, a multiple of
    #    512 -> zero-copy Pallas path (rows=2048, tile_rows=512, grid=(4,)).
    big_attr = jax.random.normal(k4, (4096, 256), dtype=jnp.float32)
    _, _, big_out, _, _ = edge_feat_shift(x, edge_index, big_attr, batch,
                                          p=0.05)
    jax.block_until_ready(big_out)
    assert jnp.allclose(big_out, big_attr + 0.05, atol=1e-6)

    # 3) Ragged case: 1025*300 = 307,500 elements (not a multiple of 512).
    #    Exercises the masked partial last row-block plus the tail stitch.
    odd_attr = jax.random.normal(k5, (1025, 300), dtype=jnp.float32)
    _, _, odd_out, _, _ = edge_feat_shift(x, edge_index, odd_attr, batch,
                                          p=0.05)
    jax.block_until_ready(odd_out)
    assert jnp.allclose(odd_out, odd_attr + 0.05, atol=1e-6)

    # 4) Same shapes, different p: must not recompile (p is a runtime scalar)
    #    and must still be numerically correct.
    _, _, big_out2, _, _ = edge_feat_shift(x, edge_index, big_attr, batch,
                                           p=-0.125)
    jax.block_until_ready(big_out2)
    assert jnp.allclose(big_out2, big_attr - 0.125, atol=1e-6)

    print("KERNEL_OK")
</pallas_src>

<mosaic_0001>
module attributes {stable_mosaic.version = 11 : i64} {
  func.func @_shift_kernel(%arg0: i32, %arg1: memref<1xf32, #tpu.memory_space<smem>>, %arg2: memref<512x512xf32, #tpu.memory_space<vmem>>, %arg3: memref<512x512xf32, #tpu.memory_space<vmem>>) attributes {dimension_semantics = [#tpu.dimension_semantics<parallel>], iteration_bounds = array<i64: 4>, scalar_prefetch = 0 : i64, scratch_operands = 0 : i64, tpu.core_type = #tpu.core_type<tc>, window_params = [{transform_indices = @transform_0, window_bounds = array<i64: 1>}, {transform_indices = @transform_1, window_bounds = array<i64: 512, 512>}, {transform_indices = @transform_2, window_bounds = array<i64: 512, 512>}]} {
    %c0 = arith.constant 0 : index
    %c0_0 = arith.constant 0 : index
    %0 = vector.load %arg2[%c0, %c0_0] : memref<512x512xf32, #tpu.memory_space<vmem>>, vector<512x512xf32>
    %c0_1 = arith.constant 0 : index
    %1 = memref.load %arg1[%c0_1] : memref<1xf32, #tpu.memory_space<smem>>
    %2 = vector.broadcast %1 : f32 to vector<512x512xf32>
    %3 = arith.addf %0, %2 : vector<512x512xf32>
    %c0_2 = arith.constant 0 : index
    %c0_3 = arith.constant 0 : index
    %4 = vector.load %arg3[%c0_2, %c0_3] : memref<512x512xf32, #tpu.memory_space<vmem>>, vector<512x512xf32>
    tpu.vector_store %arg3[%c0_2, %c0_3], %3 {strides = array<i32>} : memref<512x512xf32, #tpu.memory_space<vmem>>, vector<512x512xf32>,
    return
  }
  func.func @transform_0(%arg0: i32) -> i32 {
    %c0_i32 = arith.constant 0 : i32
    %c0_i32_0 = arith.constant 0 : i32
    return %c0_i32 : i32
  }
  func.func @transform_1(%arg0: i32) -> (i32, i32) {
    %c0_i32 = arith.constant 0 : i32
    %c0_i32_0 = arith.constant 0 : i32
    return %arg0, %c0_i32 : i32, i32
  }
  func.func @transform_2(%arg0: i32) -> (i32, i32) {
    %c0_i32 = arith.constant 0 : i32
    %c0_i32_0 = arith.constant 0 : i32
    return %arg0, %c0_i32 : i32, i32
  }
}

</mosaic_0001>

<llo_original>
// kernel: _shift_large.1
$region0: #{_shift_large.1}
  #allocation0 [shape = 'u32[]', space=smem, size = 0x4, offset = 0x4, fixed_abs, tag = 'smem constant byte address 0x4 - core index']
  #allocation1 [shape = 'u32[72,128]{1,0:T(1,128)}', space=vmem, size = 0x9000, scoped, tag = 'internal scratch']
  #allocation2 [shape = 'f32[1]{0:T(128)S(6)}', space=smem, size = 0x200, scoped, tag = 'scoped memory for _shift_large.1']
  %s0 = inlined_call_operand.<no memory space> [shape: f32[1], index: 0, kind: input, shape index: {}]
  %s1 = inlined_call_operand.vmem [shape: f32[2048,512], index: 1, kind: input, shape index: {}]
  %s2 = inlined_call_operand.vmem [shape: f32[2048,512], index: 2, kind: output, shape index: {}]
  %s3 = sld [smem:[#allocation0]]
  $region41: #{_shift_large.1} parent=0
    _
  %s5 = ssub.s32 1, %s3
  %s6 = scalar_select 0, %s5, %s3
  %7 = sst [smem:[#allocation2]] %s0
  loop: start=0, step=1, limit=6
  $region2: #{_shift_large.1} parent=0 // loop_pre_header
    _
  $region3: #{_shift_large.1} parent=0 // loop_header
    %s9 = sphi 0, %s13
    %p10 = scmp.ge.s32.totalorder %s9, 6
    %s17 = sphi 0, %s17
    %s19 = sphi 0, %s17
    %s20 = sphi 0, %s19
    %s34 = sphi 0, %s20
    %s40 = sphi 0, %s42
    %s43 = sphi 0, %s40
    %s44 = sphi 0, %s43
    %s60 = sphi 0, %s44
    %s66 = sphi 0, %s68
    %s69 = sphi 0, %s66
    %s70 = sphi 0, %s69
    %s86 = sphi 0, %s70
  $region4: #{_shift_large.1} parent=0 // loop_header_branch
    %12 = sbr.rel (%p10) target = $region8
  $region5: #{_shift_large.1} parent=0 // loop_body
    %s14 = ssub.s32 %s9, 1
    %s15 = ssub.s32 %s9, 2
    %s16 = sadd.s32 %s9, 1
    %s18 = sadd.s32 %s17, 1
    %p21 = scmp.eq.s32.totalorder %s9, 3
    %p22 = scmp.ne.s32.totalorder %s17, %s19
    %p23 = scmp.eq.s32.totalorder %s9, 0
    %p24 = por %p22, %p23
    %p25 = scmp.ne.s32.totalorder %s17, %s19
    %p26 = scmp.eq.s32.totalorder %s14, 3
    %p27 = por %p25, %p26
    %p28 = scmp.ne.s32.totalorder %s19, %s20
    %p29 = scmp.eq.s32.totalorder %s14, 0
    %p30 = por %p28, %p29
    %p31 = scmp.ne.s32.totalorder %s19, %s20
    %p32 = scmp.eq.s32.totalorder %s15, 3
    %p33 = por %p31, %p32
    %p35 = scmp.ne.s32.totalorder %s20, %s34
    %p36 = scmp.eq.s32.totalorder %s15, 0
    %p37 = por %p35, %p36
    %s38 = ssub.s32 %s9, %s16
    %p39 = scmp.eq.s32.totalorder %s38, 0
    %s41 = sadd.s32 %s40, 1
    %s42 = scalar_select %p39, %s40, %s41
    %p45 = pneg %p39
    %p46 = scmp.eq.s32.totalorder %s9, 3
    %p47 = por %p45, %p46
    %p48 = scmp.ne.s32.totalorder %s40, %s43
    %p49 = scmp.eq.s32.totalorder %s9, 0
    %p50 = por %p48, %p49
    %p51 = scmp.ne.s32.totalorder %s40, %s43
    %p52 = scmp.eq.s32.totalorder %s14, 3
    %p53 = por %p51, %p52
    %p54 = scmp.ne.s32.totalorder %s43, %s44
    %p55 = scmp.eq.s32.totalorder %s14, 0
    %p56 = por %p54, %p55
    %p57 = scmp.ne.s32.totalorder %s43, %s44
    %p58 = scmp.eq.s32.totalorder %s15, 3
    %p59 = por %p57, %p58
    %p61 = scmp.ne.s32.totalorder %s44, %s60
    %p62 = scmp.eq.s32.totalorder %s15, 0
    %p63 = por %p61, %p62
    %s64 = ssub.s32 %s9, %s16
    %p65 = scmp.eq.s32.totalorder %s64, 0
    %s67 = sadd.s32 %s66, 1
    %s68 = scalar_select %p65, %s66, %s67
    %p71 = pneg %p65
    %p72 = scmp.eq.s32.totalorder %s9, 3
    %p73 = por %p71, %p72
    %p74 = scmp.ne.s32.totalorder %s66, %s69
    %p75 = scmp.eq.s32.totalorder %s9, 0
    %p76 = por %p74, %p75
    %p77 = scmp.ne.s32.totalorder %s66, %s69
    %p78 = scmp.eq.s32.totalorder %s14, 3
    %p79 = por %p77, %p78
    %p80 = scmp.ne.s32.totalorder %s69, %s70
    %p81 = scmp.eq.s32.totalorder %s14, 0
    %p82 = por %p80, %p81
    %p83 = scmp.ne.s32.totalorder %s69, %s70
    %p84 = scmp.eq.s32.totalorder %s15, 3
    %p85 = por %p83, %p84
    %p87 = scmp.ne.s32.totalorder %s70, %s86
    %p88 = scmp.eq.s32.totalorder %s15, 0
    %p89 = por %p87, %p88
    %p90 = scmp.le.s32.totalorder 1, %s9
    %p91 = scmp.lt.s32.totalorder %s9, 5
    %p92 = pnand %p90, %p91
    %p93 = pneg %p92
    // Predicated region
    $region9: #{_shift_large.1} parent=5 // pred_check
      _
    $region10: #{_shift_large.1} parent=5 // pred_check_branch
      %95 = sbr.rel (%p92) target = $region12
    $region11: #{_shift_large.1} parent=5 // pred_region
      %s96 = ssub.s32 %s9, 1
      // Predicated region
      $region13: #{_shift_large.1} parent=11 // pred_check
        %p97 = pneg %p30
      $region14: #{_shift_large.1} parent=11 // pred_check_branch
        %99 = sbr.rel (%p97) target = $region16
      $region15: #{_shift_large.1} parent=11 // pred_region
        _
      $region16: #{_shift_large.1} parent=11 // pred_fallthru
        _
    $region12: #{_shift_large.1} parent=5 // pred_fallthru
      _
    %p100 = scmp.lt.s32.totalorder %s9, 4
    // Predicated region
    $region17: #{_shift_large.1} parent=5 // pred_check
      %p101 = pneg %p100
    $region18: #{_shift_large.1} parent=5 // pred_check_branch
      %103 = sbr.rel (%p101) target = $region20
    $region19: #{_shift_large.1} parent=5 // pred_region
      // Predicated region
      $region21: #{_shift_large.1} parent=19 // pred_check
        %p104 = pneg %p50
      $region22: #{_shift_large.1} parent=19 // pred_check_branch
        %106 = sbr.rel (%p104) target = $region24
      $region23: #{_shift_large.1} parent=19 // pred_region
        %s107 = smul.u32 64, %s9
        %p108 = scmp.lt.s32.totalorder %s107, 255
        %s109 = scalar_select %p108, %s107, 255
        %s110 = smul.addr %s109, 4
        %s111 = smul.addr %s110, 8
        %s112 = scalar_lea.vmem %s1, %s111
        %s113 = smul.u32 64, %s9
      $region24: #{_shift_large.1} parent=19 // pred_fallthru
        _
    $region20: #{_shift_large.1} parent=5 // pred_fallthru
      _
    %p114 = scmp.le.s32.totalorder 1, %s9
    %p115 = scmp.lt.s32.totalorder %s9, 5
    %p116 = pnand %p114, %p115
    %p117 = pneg %p116
    // Predicated region
    $region25: #{_shift_large.1} parent=5 // pred_check
      _
    $region26: #{_shift_large.1} parent=5 // pred_check_branch
      %119 = sbr.rel (%p116) target = $region28
    $region27: #{_shift_large.1} parent=5 // pred_region
      %s120 = ssub.s32 %s9, 1
      %p121 = pneg %p30
      %p122 = pneg %p27
      %s123 = smul.u32 64, %s14
      %p124 = scmp.lt.s32.totalorder %s123, 255
      %s125 = scalar_select %p124, %s123, 255
      %s126 = smul.addr %s125, 4
      %s127 = smul.addr %s126, 8
      %s128 = scalar_lea.vmem %s1, %s127
      %p129 = pneg %p56
      %p130 = pneg %p53
      %p131 = pneg %p82
      %p132 = pneg %p79
      %s133 = smul.u32 64, %s14
      %p134 = scmp.lt.s32.totalorder %s133, 255
      %s135 = scalar_select %p134, %s133, 255
      %s136 = smul.addr %s135, 4
      %s137 = smul.addr %s136, 8
      %s138 = scalar_lea.vmem %s2, %s137
      %s139 = smul.u32 64, %s14
      %p140 = scmp.lt.s32.totalorder %s139, 255
      %s141 = scalar_select %p140, %s139, 255
      %s142 = smul.addr %s141, 4
      %s143 = smul.addr %s142, 8
      %s144 = scalar_lea.vmem %s1, %s143
      %s145 = smul.u32 64, %s14
      %s146 = smul.u32 64, %s14
      %p147 = scmp.lt.s32.totalorder %s146, 255
      %s148 = scalar_select %p147, %s146, 255
      %s149 = smul.addr %s148, 4
      %s150 = smul.addr %s149, 8
      %s151 = scalar_lea.vmem %s2, %s150
      %s152 = smul.u32 64, %s14
      %v153 = vld [vmem:[%s144] sm:$0xff]
      %v154 = vld [vmem:[%s144 + $0x8] sm:$0xff]
      %v155 = vld [vmem:[%s144 + $0x10] sm:$0xff]
      %v156 = vld [vmem:[%s144 + $0x18] sm:$0xff]
      %v157 = vld [vmem:[%s144 + $0x20] sm:$0xff]
      %v158 = vld [vmem:[%s144 + $0x28] sm:$0xff]
      %v159 = vld [vmem:[%s144 + $0x30] sm:$0xff]
      %v160 = vld [vmem:[%s144 + $0x38] sm:$0xff]
      %v161 = vld [vmem:[%s144 + $0x40] sm:$0xff]
      %v162 = vld [vmem:[%s144 + $0x48] sm:$0xff]
      %v163 = vld [vmem:[%s144 + $0x50] sm:$0xff]
      %v164 = vld [vmem:[%s144 + $0x58] sm:$0xff]
      %v165 = vld [vmem:[%s144 + $0x60] sm:$0xff]
      %v166 = vld [vmem:[%s144 + $0x68] sm:$0xff]
      %v167 = vld [vmem:[%s144 + $0x70] sm:$0xff]
      %v168 = vld [vmem:[%s144 + $0x78] sm:$0xff]
      %v169 = vld [vmem:[%s144 + $0x80] sm:$0xff]
      %v170 = vld [vmem:[%s144 + $0x88] sm:$0xff]
      %v171 = vld [vmem:[%s144 + $0x90] sm:$0xff]
      %v172 = vld [vmem:[%s144 + $0x98] sm:$0xff]
      %v173 = vld [vmem:[%s144 + $0xa0] sm:$0xff]
      %v174 = vld [vmem:[%s144 + $0xa8] sm:$0xff]
      %v175 = vld [vmem:[%s144 + $0xb0] sm:$0xff]
      %v176 = vld [vmem:[%s144 + $0xb8] sm:$0xff]
      %v177 = vld [vmem:[%s144 + $0xc0] sm:$0xff]
      %v178 = vld [vmem:[%s144 + $0xc8] sm:$0xff]
      %v179 = vld [vmem:[%s144 + $0xd0] sm:$0xff]
      %v180 = vld [vmem:[%s144 + $0xd8] sm:$0xff]
      %v181 = vld [vmem:[%s144 + $0xe0] sm:$0xff]
      %v182 = vld [vmem:[%s144 + $0xe8] sm:$0xff]
      %v183 = vld [vmem:[%s144 + $0xf0] sm:$0xff]
      %v184 = vld [vmem:[%s144 + $0xf8] sm:$0xff]
      %v185 = vld [vmem:[%s144 + $0x100] sm:$0xff]
      %v186 = vld [vmem:[%s144 + $0x108] sm:$0xff]
      %v187 = vld [vmem:[%s144 + $0x110] sm:$0xff]
      %v188 = vld [vmem:[%s144 + $0x118] sm:$0xff]
      %v189 = vld [vmem:[%s144 + $0x120] sm:$0xff]
      %v190 = vld [vmem:[%s144 + $0x128] sm:$0xff]
      %v191 = vld [vmem:[%s144 + $0x130] sm:$0xff]
      %v192 = vld [vmem:[%s144 + $0x138] sm:$0xff]
      %v193 = vld [vmem:[%s144 + $0x140] sm:$0xff]
      %v194 = vld [vmem:[%s144 + $0x148] sm:$0xff]
      %v195 = vld [vmem:[%s144 + $0x150] sm:$0xff]
      %v196 = vld [vmem:[%s144 + $0x158] sm:$0xff]
      %v197 = vld [vmem:[%s144 + $0x160] sm:$0xff]
      %v198 = vld [vmem:[%s144 + $0x168] sm:$0xff]
      %v199 = vld [vmem:[%s144 + $0x170] sm:$0xff]
      %v200 = vld [vmem:[%s144 + $0x178] sm:$0xff]
      %v201 = vld [vmem:[%s144 + $0x180] sm:$0xff]
      %v202 = vld [vmem:[%s144 + $0x188] sm:$0xff]
      %v203 = vld [vmem:[%s144 + $0x190] sm:$0xff]
      %v204 = vld [vmem:[%s144 + $0x198] sm:$0xff]
      %v205 = vld [vmem:[%s144 + $0x1a0] sm:$0xff]
      %v206 = vld [vmem:[%s144 + $0x1a8] sm:$0xff]
      %v207 = vld [vmem:[%s144 + $0x1b0] sm:$0xff]
      %v208 = vld [vmem:[%s144 + $0x1b8] sm:$0xff]
      %v209 = vld [vmem:[%s144 + $0x1c0] sm:$0xff]
      %v210 = vld [vmem:[%s144 + $0x1c8] sm:$0xff]
      %v211 = vld [vmem:[%s144 + $0x1d0] sm:$0xff]
      %v212 = vld [vmem:[%s144 + $0x1d8] sm:$0xff]
      %v213 = vld [vmem:[%s144 + $0x1e0] sm:$0xff]
      %v214 = vld [vmem:[%s144 + $0x1e8] sm:$0xff]
      %v215 = vld [vmem:[%s144 + $0x1f0] sm:$0xff]
      %v216 = vld [vmem:[%s144 + $0x1f8] sm:$0xff]
      %v217 = vld [vmem:[%s144 + $0x200] sm:$0xff]
      %v218 = vld [vmem:[%s144 + $0x208] sm:$0xff]
      %v219 = vld [vmem:[%s144 + $0x210] sm:$0xff]
      %v220 = vld [vmem:[%s144 + $0x218] sm:$0xff]
      %v221 = vld [vmem:[%s144 + $0x220] sm:$0xff]
      %v222 = vld [vmem:[%s144 + $0x228] sm:$0xff]
      %v223 = vld [vmem:[%s144 + $0x230] sm:$0xff]
      %v224 = vld [vmem:[%s144 + $0x238] sm:$0xff]
      %v225 = vld [vmem:[%s144 + $0x240] sm:$0xff]
      %v226 = vld [vmem:[%s144 + $0x248] sm:$0xff]
      %v227 = vld [vmem:[%s144 + $0x250] sm:$0xff]
      %v228 = vld [vmem:[%s144 + $0x258] sm:$0xff]
      %v229 = vld [vmem:[%s144 + $0x260] sm:$0xff]
      %v230 = vld [vmem:[%s144 + $0x268] sm:$0xff]
      %v231 = vld [vmem:[%s144 + $0x270] sm:$0xff]
      %v232 = vld [vmem:[%s144 + $0x278] sm:$0xff]
      %v233 = vld [vmem:[%s144 + $0x280] sm:$0xff]
      %v234 = vld [vmem:[%s144 + $0x288] sm:$0xff]
      %v235 = vld [vmem:[%s144 + $0x290] sm:$0xff]
      %v236 = vld [vmem:[%s144 + $0x298] sm:$0xff]
      %v237 = vld [vmem:[%s144 + $0x2a0] sm:$0xff]
      %v238 = vld [vmem:[%s144 + $0x2a8] sm:$0xff]
      %v239 = vld [vmem:[%s144 + $0x2b0] sm:$0xff]
      %v240 = vld [vmem:[%s144 + $0x2b8] sm:$0xff]
      %v241 = vld [vmem:[%s144 + $0x2c0] sm:$0xff]
      %v242 = vld [vmem:[%s144 + $0x2c8] sm:$0xff]
      %v243 = vld [vmem:[%s144 + $0x2d0] sm:$0xff]
      %v244 = vld [vmem:[%s144 + $0x2d8] sm:$0xff]
      %v245 = vld [vmem:[%s144 + $0x2e0] sm:$0xff]
      %v246 = vld [vmem:[%s144 + $0x2e8] sm:$0xff]
      %v247 = vld [vmem:[%s144 + $0x2f0] sm:$0xff]
      %v248 = vld [vmem:[%s144 + $0x2f8] sm:$0xff]
      %v249 = vld [vmem:[%s144 + $0x300] sm:$0xff]
      %v250 = vld [vmem:[%s144 + $0x308] sm:$0xff]
      %v251 = vld [vmem:[%s144 + $0x310] sm:$0xff]
      %v252 = vld [vmem:[%s144 + $0x318] sm:$0xff]
      %v253 = vld [vmem:[%s144 + $0x320] sm:$0xff]
      %v254 = vld [vmem:[%s144 + $0x328] sm:$0xff]
      %v255 = vld [vmem:[%s144 + $0x330] sm:$0xff]
      %v256 = vld [vmem:[%s144 + $0x338] sm:$0xff]
      %v257 = vld [vmem:[%s144 + $0x340] sm:$0xff]
      %v258 = vld [vmem:[%s144 + $0x348] sm:$0xff]
      %v259 = vld [vmem:[%s144 + $0x350] sm:$0xff]
      %v260 = vld [vmem:[%s144 + $0x358] sm:$0xff]
      %v261 = vld [vmem:[%s144 + $0x360] sm:$0xff]
      %v262 = vld [vmem:[%s144 + $0x368] sm:$0xff]
      %v263 = vld [vmem:[%s144 + $0x370] sm:$0xff]
      %v264 = vld [vmem:[%s144 + $0x378] sm:$0xff]
      %v265 = vld [vmem:[%s144 + $0x380] sm:$0xff]
      %v266 = vld [vmem:[%s144 + $0x388] sm:$0xff]
      %v267 = vld [vmem:[%s144 + $0x390] sm:$0xff]
      %v268 = vld [vmem:[%s144 + $0x398] sm:$0xff]
      %v269 = vld [vmem:[%s144 + $0x3a0] sm:$0xff]
      %v270 = vld [vmem:[%s144 + $0x3a8] sm:$0xff]
      %v271 = vld [vmem:[%s144 + $0x3b0] sm:$0xff]
      %v272 = vld [vmem:[%s144 + $0x3b8] sm:$0xff]
      %v273 = vld [vmem:[%s144 + $0x3c0] sm:$0xff]
      %v274 = vld [vmem:[%s144 + $0x3c8] sm:$0xff]
      %v275 = vld [vmem:[%s144 + $0x3d0] sm:$0xff]
      %v276 = vld [vmem:[%s144 + $0x3d8] sm:$0xff]
      %v277 = vld [vmem:[%s144 + $0x3e0] sm:$0xff]
      %v278 = vld [vmem:[%s144 + $0x3e8] sm:$0xff]
      %v279 = vld [vmem:[%s144 + $0x3f0] sm:$0xff]
      %v280 = vld [vmem:[%s144 + $0x3f8] sm:$0xff]
      %v281 = vld [vmem:[%s144 + $0x400] sm:$0xff]
      %v282 = vld [vmem:[%s144 + $0x408] sm:$0xff]
      %v283 = vld [vmem:[%s144 + $0x410] sm:$0xff]
      %v284 = vld [vmem:[%s144 + $0x418] sm:$0xff]
      %v285 = vld [vmem:[%s144 + $0x420] sm:$0xff]
      %v286 = vld [vmem:[%s144 + $0x428] sm:$0xff]
      %v287 = vld [vmem:[%s144 + $0x430] sm:$0xff]
      %v288 = vld [vmem:[%s144 + $0x438] sm:$0xff]
      %v289 = vld [vmem:[%s144 + $0x440] sm:$0xff]
      %v290 = vld [vmem:[%s144 + $0x448] sm:$0xff]
      %v291 = vld [vmem:[%s144 + $0x450] sm:$0xff]
      %v292 = vld [vmem:[%s144 + $0x458] sm:$0xff]
      %v293 = vld [vmem:[%s144 + $0x460] sm:$0xff]
      %v294 = vld [vmem:[%s144 + $0x468] sm:$0xff]
      %v295 = vld [vmem:[%s144 + $0x470] sm:$0xff]
      %v296 = vld [vmem:[%s144 + $0x478] sm:$0xff]
      %v297 = vld [vmem:[%s144 + $0x480] sm:$0xff]
      %v298 = vld [vmem:[%s144 + $0x488] sm:$0xff]
      %v299 = vld [vmem:[%s144 + $0x490] sm:$0xff]
      %v300 = vld [vmem:[%s144 + $0x498] sm:$0xff]
      %v301 = vld [vmem:[%s144 + $0x4a0] sm:$0xff]
      %v302 = vld [vmem:[%s144 + $0x4a8] sm:$0xff]
      %v303 = vld [vmem:[%s144 + $0x4b0] sm:$0xff]
      %v304 = vld [vmem:[%s144 + $0x4b8] sm:$0xff]
      %v305 = vld [vmem:[%s144 + $0x4c0] sm:$0xff]
      %v306 = vld [vmem:[%s144 + $0x4c8] sm:$0xff]
      %v307 = vld [vmem:[%s144 + $0x4d0] sm:$0xff]
      %v308 = vld [vmem:[%s144 + $0x4d8] sm:$0xff]
      %v309 = vld [vmem:[%s144 + $0x4e0] sm:$0xff]
      %v310 = vld [vmem:[%s144 + $0x4e8] sm:$0xff]
      %v311 = vld [vmem:[%s144 + $0x4f0] sm:$0xff]
      %v312 = vld [vmem:[%s144 + $0x4f8] sm:$0xff]
      %v313 = vld [vmem:[%s144 + $0x500] sm:$0xff]
      %v314 = vld [vmem:[%s144 + $0x508] sm:$0xff]
      %v315 = vld [vmem:[%s144 + $0x510] sm:$0xff]
      %v316 = vld [vmem:[%s144 + $0x518] sm:$0xff]
      %v317 = vld [vmem:[%s144 + $0x520] sm:$0xff]
      %v318 = vld [vmem:[%s144 + $0x528] sm:$0xff]
      %v319 = vld [vmem:[%s144 + $0x530] sm:$0xff]
      %v320 = vld [vmem:[%s144 + $0x538] sm:$0xff]
      %v321 = vld [vmem:[%s144 + $0x540] sm:$0xff]
      %v322 = vld [vmem:[%s144 + $0x548] sm:$0xff]
      %v323 = vld [vmem:[%s144 + $0x550] sm:$0xff]
      %v324 = vld [vmem:[%s144 + $0x558] sm:$0xff]
      %v325 = vld [vmem:[%s144 + $0x560] sm:$0xff]
      %v326 = vld [vmem:[%s144 + $0x568] sm:$0xff]
      %v327 = vld [vmem:[%s144 + $0x570] sm:$0xff]
      %v328 = vld [vmem:[%s144 + $0x578] sm:$0xff]
      %v329 = vld [vmem:[%s144 + $0x580] sm:$0xff]
      %v330 = vld [vmem:[%s144 + $0x588] sm:$0xff]
      %v331 = vld [vmem:[%s144 + $0x590] sm:$0xff]
      %v332 = vld [vmem:[%s144 + $0x598] sm:$0xff]
      %v333 = vld [vmem:[%s144 + $0x5a0] sm:$0xff]
      %v334 = vld [vmem:[%s144 + $0x5a8] sm:$0xff]
      %v335 = vld [vmem:[%s144 + $0x5b0] sm:$0xff]
      %v336 = vld [vmem:[%s144 + $0x5b8] sm:$0xff]
      %v337 = vld [vmem:[%s144 + $0x5c0] sm:$0xff]
      %v338 = vld [vmem:[%s144 + $0x5c8] sm:$0xff]
      %v339 = vld [vmem:[%s144 + $0x5d0] sm:$0xff]
      %v340 = vld [vmem:[%s144 + $0x5d8] sm:$0xff]
      %v341 = vld [vmem:[%s144 + $0x5e0] sm:$0xff]
      %v342 = vld [vmem:[%s144 + $0x5e8] sm:$0xff]
      %v343 = vld [vmem:[%s144 + $0x5f0] sm:$0xff]
      %v344 = vld [vmem:[%s144 + $0x5f8] sm:$0xff]
      %v345 = vld [vmem:[%s144 + $0x600] sm:$0xff]
      %v346 = vld [vmem:[%s144 + $0x608] sm:$0xff]
      %v347 = vld [vmem:[%s144 + $0x610] sm:$0xff]
      %v348 = vld [vmem:[%s144 + $0x618] sm:$0xff]
      %v349 = vld [vmem:[%s144 + $0x620] sm:$0xff]
      %v350 = vld [vmem:[%s144 + $0x628] sm:$0xff]
      %v351 = vld [vmem:[%s144 + $0x630] sm:$0xff]
      %v352 = vld [vmem:[%s144 + $0x638] sm:$0xff]
      %v353 = vld [vmem:[%s144 + $0x640] sm:$0xff]
      %v354 = vld [vmem:[%s144 + $0x648] sm:$0xff]
      %v355 = vld [vmem:[%s144 + $0x650] sm:$0xff]
      %v356 = vld [vmem:[%s144 + $0x658] sm:$0xff]
      %v357 = vld [vmem:[%s144 + $0x660] sm:$0xff]
      %v358 = vld [vmem:[%s144 + $0x668] sm:$0xff]
      %v359 = vld [vmem:[%s144 + $0x670] sm:$0xff]
      %v360 = vld [vmem:[%s144 + $0x678] sm:$0xff]
      %v361 = vld [vmem:[%s144 + $0x680] sm:$0xff]
      %v362 = vld [vmem:[%s144 + $0x688] sm:$0xff]
      %v363 = vld [vmem:[%s144 + $0x690] sm:$0xff]
      %v364 = vld [vmem:[%s144 + $0x698] sm:$0xff]
      %v365 = vld [vmem:[%s144 + $0x6a0] sm:$0xff]
      %v366 = vld [vmem:[%s144 + $0x6a8] sm:$0xff]
      %v367 = vld [vmem:[%s144 + $0x6b0] sm:$0xff]
      %v368 = vld [vmem:[%s144 + $0x6b8] sm:$0xff]
      %v369 = vld [vmem:[%s144 + $0x6c0] sm:$0xff]
      %v370 = vld [vmem:[%s144 + $0x6c8] sm:$0xff]
      %v371 = vld [vmem:[%s144 + $0x6d0] sm:$0xff]
      %v372 = vld [vmem:[%s144 + $0x6d8] sm:$0xff]
      %v373 = vld [vmem:[%s144 + $0x6e0] sm:$0xff]
      %v374 = vld [vmem:[%s144 + $0x6e8] sm:$0xff]
      %v375 = vld [vmem:[%s144 + $0x6f0] sm:$0xff]
      %v376 = vld [vmem:[%s144 + $0x6f8] sm:$0xff]
      %v377 = vld [vmem:[%s144 + $0x700] sm:$0xff]
      %v378 = vld [vmem:[%s144 + $0x708] sm:$0xff]
      %v379 = vld [vmem:[%s144 + $0x710] sm:$0xff]
      %v380 = vld [vmem:[%s144 + $0x718] sm:$0xff]
      %v381 = vld [vmem:[%s144 + $0x720] sm:$0xff]
      %v382 = vld [vmem:[%s144 + $0x728] sm:$0xff]
      %v383 = vld [vmem:[%s144 + $0x730] sm:$0xff]
      %v384 = vld [vmem:[%s144 + $0x738] sm:$0xff]
      %v385 = vld [vmem:[%s144 + $0x740] sm:$0xff]
      %v386 = vld [vmem:[%s144 + $0x748] sm:$0xff]
      %v387 = vld [vmem:[%s144 + $0x750] sm:$0xff]
      %v388 = vld [vmem:[%s144 + $0x758] sm:$0xff]
      %v389 = vld [vmem:[%s144 + $0x760] sm:$0xff]
      %v390 = vld [vmem:[%s144 + $0x768] sm:$0xff]
      %v391 = vld [vmem:[%s144 + $0x770] sm:$0xff]
      %v392 = vld [vmem:[%s144 + $0x778] sm:$0xff]
      %v393 = vld [vmem:[%s144 + $0x780] sm:$0xff]
      %v394 = vld [vmem:[%s144 + $0x788] sm:$0xff]
      %v395 = vld [vmem:[%s144 + $0x790] sm:$0xff]
      %v396 = vld [vmem:[%s144 + $0x798] sm:$0xff]
      %v397 = vld [vmem:[%s144 + $0x7a0] sm:$0xff]
      %v398 = vld [vmem:[%s144 + $0x7a8] sm:$0xff]
      %v399 = vld [vmem:[%s144 + $0x7b0] sm:$0xff]
      %v400 = vld [vmem:[%s144 + $0x7b8] sm:$0xff]
      %v401 = vld [vmem:[%s144 + $0x7c0] sm:$0xff]
      %v402 = vld [vmem:[%s144 + $0x7c8] sm:$0xff]
      %v403 = vld [vmem:[%s144 + $0x7d0] sm:$0xff]
      %v404 = vld [vmem:[%s144 + $0x7d8] sm:$0xff]
      %v405 = vld [vmem:[%s144 + $0x7e0] sm:$0xff]
      %v406 = vld [vmem:[%s144 + $0x7e8] sm:$0xff]
      %v407 = vld [vmem:[%s144 + $0x7f0] sm:$0xff]
      %v408 = vld [vmem:[%s144 + $0x7f8] sm:$0xff]
      %s409 = sld [smem:[#allocation2]]
      %v410 = vstv %s409
      %v411 = vadd.f32 %v153, %v410
      %v412 = vadd.f32 %v154, %v410
      %v413 = vadd.f32 %v155, %v410
      %v414 = vadd.f32 %v156, %v410
      %v415 = vadd.f32 %v157, %v410
      %v416 = vadd.f32 %v158, %v410
      %v417 = vadd.f32 %v159, %v410
      %v418 = vadd.f32 %v160, %v410
      %v419 = vadd.f32 %v161, %v410
      %v420 = vadd.f32 %v162, %v410
      %v421 = vadd.f32 %v163, %v410
      %v422 = vadd.f32 %v164, %v410
      %v423 = vadd.f32 %v165, %v410
      %v424 = vadd.f32 %v166, %v410
      %v425 = vadd.f32 %v167, %v410
      %v426 = vadd.f32 %v168, %v410
      %v427 = vadd.f32 %v169, %v410
      %v428 = vadd.f32 %v170, %v410
      %v429 = vadd.f32 %v171, %v410
      %v430 = vadd.f32 %v172, %v410
      %v431 = vadd.f32 %v173, %v410
      %v432 = vadd.f32 %v174, %v410
      %v433 = vadd.f32 %v175, %v410
      %v434 = vadd.f32 %v176, %v410
      %v435 = vadd.f32 %v177, %v410
      %v436 = vadd.f32 %v178, %v410
      %v437 = vadd.f32 %v179, %v410
      %v438 = vadd.f32 %v180, %v410
      %v439 = vadd.f32 %v181, %v410
      %v440 = vadd.f32 %v182, %v410
      %v441 = vadd.f32 %v183, %v410
      %v442 = vadd.f32 %v184, %v410
      %v443 = vadd.f32 %v185, %v410
      %v444 = vadd.f32 %v186, %v410
      %v445 = vadd.f32 %v187, %v410
      %v446 = vadd.f32 %v188, %v410
      %v447 = vadd.f32 %v189, %v410
      %v448 = vadd.f32 %v190, %v410
      %v449 = vadd.f32 %v191, %v410
      %v450 = vadd.f32 %v192, %v410
      %v451 = vadd.f32 %v193, %v410
      %v452 = vadd.f32 %v194, %v410
      %v453 = vadd.f32 %v195, %v410
      %v454 = vadd.f32 %v196, %v410
      %v455 = vadd.f32 %v197, %v410
      %v456 = vadd.f32 %v198, %v410
      %v457 = vadd.f32 %v199, %v410
      %v458 = vadd.f32 %v200, %v410
      %v459 = vadd.f32 %v201, %v410
      %v460 = vadd.f32 %v202, %v410
      %v461 = vadd.f32 %v203, %v410
      %v462 = vadd.f32 %v204, %v410
      %v463 = vadd.f32 %v205, %v410
      %v464 = vadd.f32 %v206, %v410
      %v465 = vadd.f32 %v207, %v410
      %v466 = vadd.f32 %v208, %v410
      %v467 = vadd.f32 %v209, %v410
      %v468 = vadd.f32 %v210, %v410
      %v469 = vadd.f32 %v211, %v410
      %v470 = vadd.f32 %v212, %v410
      %v471 = vadd.f32 %v213, %v410
      %v472 = vadd.f32 %v214, %v410
      %v473 = vadd.f32 %v215, %v410
      %v474 = vadd.f32 %v216, %v410
      %v475 = vadd.f32 %v217, %v410
      %v476 = vadd.f32 %v218, %v410
      %v477 = vadd.f32 %v219, %v410
      %v478 = vadd.f32 %v220, %v410
      %v479 = vadd.f32 %v221, %v410
      %v480 = vadd.f32 %v222, %v410
      %v481 = vadd.f32 %v223, %v410
      %v482 = vadd.f32 %v224, %v410
      %v483 = vadd.f32 %v225, %v410
      %v484 = vadd.f32 %v226, %v410
      %v485 = vadd.f32 %v227, %v410
      %v486 = vadd.f32 %v228, %v410
      %v487 = vadd.f32 %v229, %v410
      %v488 = vadd.f32 %v230, %v410
      %v489 = vadd.f32 %v231, %v410
      %v490 = vadd.f32 %v232, %v410
      %v491 = vadd.f32 %v233, %v410
      %v492 = vadd.f32 %v234, %v410
      %v493 = vadd.f32 %v235, %v410
      %v494 = vadd.f32 %v236, %v410
      %v495 = vadd.f32 %v237, %v410
      %v496 = vadd.f32 %v238, %v410
      %v497 = vadd.f32 %v239, %v410
      %v498 = vadd.f32 %v240, %v410
      %v499 = vadd.f32 %v241, %v410
      %v500 = vadd.f32 %v242, %v410
      %v501 = vadd.f32 %v243, %v410
      %v502 = vadd.f32 %v244, %v410
      %v503 = vadd.f32 %v245, %v410
      %v504 = vadd.f32 %v246, %v410
      %v505 = vadd.f32 %v247, %v410
      %v506 = vadd.f32 %v248, %v410
      %v507 = vadd.f32 %v249, %v410
      %v508 = vadd.f32 %v250, %v410
      %v509 = vadd.f32 %v251, %v410
      %v510 = vadd.f32 %v252, %v410
      %v511 = vadd.f32 %v253, %v410
      %v512 = vadd.f32 %v254, %v410
      %v513 = vadd.f32 %v255, %v410
      %v514 = vadd.f32 %v256, %v410
      %v515 = vadd.f32 %v257, %v410
      %v516 = vadd.f32 %v258, %v410
      %v517 = vadd.f32 %v259, %v410
      %v518 = vadd.f32 %v260, %v410
      %v519 = vadd.f32 %v261, %v410
      %v520 = vadd.f32 %v262, %v410
      %v521 = vadd.f32 %v263, %v410
      %v522 = vadd.f32 %v264, %v410
      %v523 = vadd.f32 %v265, %v410
      %v524 = vadd.f32 %v266, %v410
      %v525 = vadd.f32 %v267, %v410
      %v526 = vadd.f32 %v268, %v410
      %v527 = vadd.f32 %v269, %v410
      %v528 = vadd.f32 %v270, %v410
      %v529 = vadd.f32 %v271, %v410
      %v530 = vadd.f32 %v272, %v410
      %v531 = vadd.f32 %v273, %v410
      %v532 = vadd.f32 %v274, %v410
      %v533 = vadd.f32 %v275, %v410
      %v534 = vadd.f32 %v276, %v410
      %v535 = vadd.f32 %v277, %v410
      %v536 = vadd.f32 %v278, %v410
      %v537 = vadd.f32 %v279, %v410
      %v538 = vadd.f32 %v280, %v410
      %v539 = vadd.f32 %v281, %v410
      %v540 = vadd.f32 %v282, %v410
      %v541 = vadd.f32 %v283, %v410
      %v542 = vadd.f32 %v284, %v410
      %v543 = vadd.f32 %v285, %v410
      %v544 = vadd.f32 %v286, %v410
      %v545 = vadd.f32 %v287, %v410
      %v546 = vadd.f32 %v288, %v410
      %v547 = vadd.f32 %v289, %v410
      %v548 = vadd.f32 %v290, %v410
      %v549 = vadd.f32 %v291, %v410
      %v550 = vadd.f32 %v292, %v410
      %v551 = vadd.f32 %v293, %v410
      %v552 = vadd.f32 %v294, %v410
      %v553 = vadd.f32 %v295, %v410
      %v554 = vadd.f32 %v296, %v410
      %v555 = vadd.f32 %v297, %v410
      %v556 = vadd.f32 %v298, %v410
      %v557 = vadd.f32 %v299, %v410
      %v558 = vadd.f32 %v300, %v410
      %v559 = vadd.f32 %v301, %v410
      %v560 = vadd.f32 %v302, %v410
      %v561 = vadd.f32 %v303, %v410
      %v562 = vadd.f32 %v304, %v410
      %v563 = vadd.f32 %v305, %v410
      %v564 = vadd.f32 %v306, %v410
      %v565 = vadd.f32 %v307, %v410
      %v566 = vadd.f32 %v308, %v410
      %v567 = vadd.f32 %v309, %v410
      %v568 = vadd.f32 %v310, %v410
      %v569 = vadd.f32 %v311, %v410
      %v570 = vadd.f32 %v312, %v410
      %v571 = vadd.f32 %v313, %v410
      %v572 = vadd.f32 %v314, %v410
      %v573 = vadd.f32 %v315, %v410
      %v574 = vadd.f32 %v316, %v410
      %v575 = vadd.f32 %v317, %v410
      %v576 = vadd.f32 %v318, %v410
      %v577 = vadd.f32 %v319, %v410
      %v578 = vadd.f32 %v320, %v410
      %v579 = vadd.f32 %v321, %v410
      %v580 = vadd.f32 %v322, %v410
      %v581 = vadd.f32 %v323, %v410
      %v582 = vadd.f32 %v324, %v410
      %v583 = vadd.f32 %v325, %v410
      %v584 = vadd.f32 %v326, %v410
      %v585 = vadd.f32 %v327, %v410
      %v586 = vadd.f32 %v328, %v410
      %v587 = vadd.f32 %v329, %v410
      %v588 = vadd.f32 %v330, %v410
      %v589 = vadd.f32 %v331, %v410
      %v590 = vadd.f32 %v332, %v410
      %v591 = vadd.f32 %v333, %v410
      %v592 = vadd.f32 %v334, %v410
      %v593 = vadd.f32 %v335, %v410
      %v594 = vadd.f32 %v336, %v410
      %v595 = vadd.f32 %v337, %v410
      %v596 = vadd.f32 %v338, %v410
      %v597 = vadd.f32 %v339, %v410
      %v598 = vadd.f32 %v340, %v410
      %v599 = vadd.f32 %v341, %v410
      %v600 = vadd.f32 %v342, %v410
      %v601 = vadd.f32 %v343, %v410
      %v602 = vadd.f32 %v344, %v410
      %v603 = vadd.f32 %v345, %v410
      %v604 = vadd.f32 %v346, %v410
      %v605 = vadd.f32 %v347, %v410
      %v606 = vadd.f32 %v348, %v410
      %v607 = vadd.f32 %v349, %v410
      %v608 = vadd.f32 %v350, %v410
      %v609 = vadd.f32 %v351, %v410
      %v610 = vadd.f32 %v352, %v410
      %v611 = vadd.f32 %v353, %v410
      %v612 = vadd.f32 %v354, %v410
      %v613 = vadd.f32 %v355, %v410
      %v614 = vadd.f32 %v356, %v410
      %v615 = vadd.f32 %v357, %v410
      %v616 = vadd.f32 %v358, %v410
      %v617 = vadd.f32 %v359, %v410
      %v618 = vadd.f32 %v360, %v410
      %v619 = vadd.f32 %v361, %v410
      %v620 = vadd.f32 %v362, %v410
      %v621 = vadd.f32 %v363, %v410
      %v622 = vadd.f32 %v364, %v410
      %v623 = vadd.f32 %v365, %v410
      %v624 = vadd.f32 %v366, %v410
      %v625 = vadd.f32 %v367, %v410
      %v626 = vadd.f32 %v368, %v410
      %v627 = vadd.f32 %v369, %v410
      %v628 = vadd.f32 %v370, %v410
      %v629 = vadd.f32 %v371, %v410
      %v630 = vadd.f32 %v372, %v410
      %v631 = vadd.f32 %v373, %v410
      %v632 = vadd.f32 %v374, %v410
      %v633 = vadd.f32 %v375, %v410
      %v634 = vadd.f32 %v376, %v410
      %v635 = vadd.f32 %v377, %v410
      %v636 = vadd.f32 %v378, %v410
      %v637 = vadd.f32 %v379, %v410
      %v638 = vadd.f32 %v380, %v410
      %v639 = vadd.f32 %v381, %v410
      %v640 = vadd.f32 %v382, %v410
      %v641 = vadd.f32 %v383, %v410
      %v642 = vadd.f32 %v384, %v410
      %v643 = vadd.f32 %v385, %v410
      %v644 = vadd.f32 %v386, %v410
      %v645 = vadd.f32 %v387, %v410
      %v646 = vadd.f32 %v388, %v410
      %v647 = vadd.f32 %v389, %v410
      %v648 = vadd.f32 %v390, %v410
      %v649 = vadd.f32 %v391, %v410
      %v650 = vadd.f32 %v392, %v410
      %v651 = vadd.f32 %v393, %v410
      %v652 = vadd.f32 %v394, %v410
      %v653 = vadd.f32 %v395, %v410
      %v654 = vadd.f32 %v396, %v410
      %v655 = vadd.f32 %v397, %v410
      %v656 = vadd.f32 %v398, %v410
      %v657 = vadd.f32 %v399, %v410
      %v658 = vadd.f32 %v400, %v410
      %v659 = vadd.f32 %v401, %v410
      %v660 = vadd.f32 %v402, %v410
      %v661 = vadd.f32 %v403, %v410
      %v662 = vadd.f32 %v404, %v410
      %v663 = vadd.f32 %v405, %v410
      %v664 = vadd.f32 %v406, %v410
      %v665 = vadd.f32 %v407, %v410
      %v666 = vadd.f32 %v408, %v410
      %667 = vst [vmem:[%s151] sm:$0xff] %v411
      %668 = vst [vmem:[%s151 + $0x8] sm:$0xff] %v412
      %669 = vst [vmem:[%s151 + $0x10] sm:$0xff] %v413
      %670 = vst [vmem:[%s151 + $0x18] sm:$0xff] %v414
      %671 = vst [vmem:[%s151 + $0x20] sm:$0xff] %v415
      %672 = vst [vmem:[%s151 + $0x28] sm:$0xff] %v416
      %673 = vst [vmem:[%s151 + $0x30] sm:$0xff] %v417
      %674 = vst [vmem:[%s151 + $0x38] sm:$0xff] %v418
      %675 = vst [vmem:[%s151 + $0x40] sm:$0xff] %v419
      %676 = vst [vmem:[%s151 + $0x48] sm:$0xff] %v420
      %677 = vst [vmem:[%s151 + $0x50] sm:$0xff] %v421
      %678 = vst [vmem:[%s151 + $0x58] sm:$0xff] %v422
      %679 = vst [vmem:[%s151 + $0x60] sm:$0xff] %v423
      %680 = vst [vmem:[%s151 + $0x68] sm:$0xff] %v424
      %681 = vst [vmem:[%s151 + $0x70] sm:$0xff] %v425
      %682 = vst [vmem:[%s151 + $0x78] sm:$0xff] %v426
      %683 = vst [vmem:[%s151 + $0x80] sm:$0xff] %v427
      %684 = vst [vmem:[%s151 + $0x88] sm:$0xff] %v428
      %685 = vst [vmem:[%s151 + $0x90] sm:$0xff] %v429
      %686 = vst [vmem:[%s151 + $0x98] sm:$0xff] %v430
      %687 = vst [vmem:[%s151 + $0xa0] sm:$0xff] %v431
      %688 = vst [vmem:[%s151 + $0xa8] sm:$0xff] %v432
      %689 = vst [vmem:[%s151 + $0xb0] sm:$0xff] %v433
      %690 = vst [vmem:[%s151 + $0xb8] sm:$0xff] %v434
      %691 = vst [vmem:[%s151 + $0xc0] sm:$0xff] %v435
      %692 = vst [vmem:[%s151 + $0xc8] sm:$0xff] %v436
      %693 = vst [vmem:[%s151 + $0xd0] sm:$0xff] %v437
      %694 = vst [vmem:[%s151 + $0xd8] sm:$0xff] %v438
      %695 = vst [vmem:[%s151 + $0xe0] sm:$0xff] %v439
      %696 = vst [vmem:[%s151 + $0xe8] sm:$0xff] %v440
      %697 = vst [vmem:[%s151 + $0xf0] sm:$0xff] %v441
      %698 = vst [vmem:[%s151 + $0xf8] sm:$0xff] %v442
      %699 = vst [vmem:[%s151 + $0x100] sm:$0xff] %v443
      %700 = vst [vmem:[%s151 + $0x108] sm:$0xff] %v444
      %701 = vst [vmem:[%s151 + $0x110] sm:$0xff] %v445
      %702 = vst [vmem:[%s151 + $0x118] sm:$0xff] %v446
      %703 = vst [vmem:[%s151 + $0x120] sm:$0xff] %v447
      %704 = vst [vmem:[%s151 + $0x128] sm:$0xff] %v448
      %705 = vst [vmem:[%s151 + $0x130] sm:$0xff] %v449
      %706 = vst [vmem:[%s151 + $0x138] sm:$0xff] %v450
      %707 = vst [vmem:[%s151 + $0x140] sm:$0xff] %v451
      %708 = vst [vmem:[%s151 + $0x148] sm:$0xff] %v452
      %709 = vst [vmem:[%s151 + $0x150] sm:$0xff] %v453
      %710 = vst [vmem:[%s151 + $0x158] sm:$0xff] %v454
      %711 = vst [vmem:[%s151 + $0x160] sm:$0xff] %v455
      %712 = vst [vmem:[%s151 + $0x168] sm:$0xff] %v456
      %713 = vst [vmem:[%s151 + $0x170] sm:$0xff] %v457
      %714 = vst [vmem:[%s151 + $0x178] sm:$0xff] %v458
      %715 = vst [vmem:[%s151 + $0x180] sm:$0xff] %v459
      %716 = vst [vmem:[%s151 + $0x188] sm:$0xff] %v460
      %717 = vst [vmem:[%s151 + $0x190] sm:$0xff] %v461
      %718 = vst [vmem:[%s151 + $0x198] sm:$0xff] %v462
      %719 = vst [vmem:[%s151 + $0x1a0] sm:$0xff] %v463
      %720 = vst [vmem:[%s151 + $0x1a8] sm:$0xff] %v464
      %721 = vst [vmem:[%s151 + $0x1b0] sm:$0xff] %v465
      %722 = vst [vmem:[%s151 + $0x1b8] sm:$0xff] %v466
      %723 = vst [vmem:[%s151 + $0x1c0] sm:$0xff] %v467
      %724 = vst [vmem:[%s151 + $0x1c8] sm:$0xff] %v468
      %725 = vst [vmem:[%s151 + $0x1d0] sm:$0xff] %v469
      %726 = vst [vmem:[%s151 + $0x1d8] sm:$0xff] %v470
      %727 = vst [vmem:[%s151 + $0x1e0] sm:$0xff] %v471
      %728 = vst [vmem:[%s151 + $0x1e8] sm:$0xff] %v472
      %729 = vst [vmem:[%s151 + $0x1f0] sm:$0xff] %v473
      %730 = vst [vmem:[%s151 + $0x1f8] sm:$0xff] %v474
      %731 = vst [vmem:[%s151 + $0x200] sm:$0xff] %v475
      %732 = vst [vmem:[%s151 + $0x208] sm:$0xff] %v476
      %733 = vst [vmem:[%s151 + $0x210] sm:$0xff] %v477
      %734 = vst [vmem:[%s151 + $0x218] sm:$0xff] %v478
      %735 = vst [vmem:[%s151 + $0x220] sm:$0xff] %v479
      %736 = vst [vmem:[%s151 + $0x228] sm:$0xff] %v480
      %737 = vst [vmem:[%s151 + $0x230] sm:$0xff] %v481
      %738 = vst [vmem:[%s151 + $0x238] sm:$0xff] %v482
      %739 = vst [vmem:[%s151 + $0x240] sm:$0xff] %v483
      %740 = vst [vmem:[%s151 + $0x248] sm:$0xff] %v484
      %741 = vst [vmem:[%s151 + $0x250] sm:$0xff] %v485
      %742 = vst [vmem:[%s151 + $0x258] sm:$0xff] %v486
      %743 = vst [vmem:[%s151 + $0x260] sm:$0xff] %v487
      %744 = vst [vmem:[%s151 + $0x268] sm:$0xff] %v488
      %745 = vst [vmem:[%s151 + $0x270] sm:$0xff] %v489
      %746 = vst [vmem:[%s151 + $0x278] sm:$0xff] %v490
      %747 = vst [vmem:[%s151 + $0x280] sm:$0xff] %v491
      %748 = vst [vmem:[%s151 + $0x288] sm:$0xff] %v492
      %749 = vst [vmem:[%s151 + $0x290] sm:$0xff] %v493
      %750 = vst [vmem:[%s151 + $0x298] sm:$0xff] %v494
      %751 = vst [vmem:[%s151 + $0x2a0] sm:$0xff] %v495
      %752 = vst [vmem:[%s151 + $0x2a8] sm:$0xff] %v496
      %753 = vst [vmem:[%s151 + $0x2b0] sm:$0xff] %v497
      %754 = vst [vmem:[%s151 + $0x2b8] sm:$0xff] %v498
      %755 = vst [vmem:[%s151 + $0x2c0] sm:$0xff] %v499
      %756 = vst [vmem:[%s151 + $0x2c8] sm:$0xff] %v500
      %757 = vst [vmem:[%s151 + $0x2d0] sm:$0xff] %v501
      %758 = vst [vmem:[%s151 + $0x2d8] sm:$0xff] %v502
      %759 = vst [vmem:[%s151 + $0x2e0] sm:$0xff] %v503
      %760 = vst [vmem:[%s151 + $0x2e8] sm:$0xff] %v504
      %761 = vst [vmem:[%s151 + $0x2f0] sm:$0xff] %v505
      %762 = vst [vmem:[%s151 + $0x2f8] sm:$0xff] %v506
      %763 = vst [vmem:[%s151 + $0x300] sm:$0xff] %v507
      %764 = vst [vmem:[%s151 + $0x308] sm:$0xff] %v508
      %765 = vst [vmem:[%s151 + $0x310] sm:$0xff] %v509
      %766 = vst [vmem:[%s151 + $0x318] sm:$0xff] %v510
      %767 = vst [vmem:[%s151 + $0x320] sm:$0xff] %v511
      %768 = vst [vmem:[%s151 + $0x328] sm:$0xff] %v512
      %769 = vst [vmem:[%s151 + $0x330] sm:$0xff] %v513
      %770 = vst [vmem:[%s151 + $0x338] sm:$0xff] %v514
      %771 = vst [vmem:[%s151 + $0x340] sm:$0xff] %v515
      %772 = vst [vmem:[%s151 + $0x348] sm:$0xff] %v516
      %773 = vst [vmem:[%s151 + $0x350] sm:$0xff] %v517
      %774 = vst [vmem:[%s151 + $0x358] sm:$0xff] %v518
      %775 = vst [vmem:[%s151 + $0x360] sm:$0xff] %v519
      %776 = vst [vmem:[%s151 + $0x368] sm:$0xff] %v520
      %777 = vst [vmem:[%s151 + $0x370] sm:$0xff] %v521
      %778 = vst [vmem:[%s151 + $0x378] sm:$0xff] %v522
      %779 = vst [vmem:[%s151 + $0x380] sm:$0xff] %v523
      %780 = vst [vmem:[%s151 + $0x388] sm:$0xff] %v524
      %781 = vst [vmem:[%s151 + $0x390] sm:$0xff] %v525
      %782 = vst [vmem:[%s151 + $0x398] sm:$0xff] %v526
      %783 = vst [vmem:[%s151 + $0x3a0] sm:$0xff] %v527
      %784 = vst [vmem:[%s151 + $0x3a8] sm:$0xff] %v528
      %785 = vst [vmem:[%s151 + $0x3b0] sm:$0xff] %v529
      %786 = vst [vmem:[%s151 + $0x3b8] sm:$0xff] %v530
      %787 = vst [vmem:[%s151 + $0x3c0] sm:$0xff] %v531
      %788 = vst [vmem:[%s151 + $0x3c8] sm:$0xff] %v532
      %789 = vst [vmem:[%s151 + $0x3d0] sm:$0xff] %v533
      %790 = vst [vmem:[%s151 + $0x3d8] sm:$0xff] %v534
      %791 = vst [vmem:[%s151 + $0x3e0] sm:$0xff] %v535
      %792 = vst [vmem:[%s151 + $0x3e8] sm:$0xff] %v536
      %793 = vst [vmem:[%s151 + $0x3f0] sm:$0xff] %v537
      %794 = vst [vmem:[%s151 + $0x3f8] sm:$0xff] %v538
      %795 = vst [vmem:[%s151 + $0x400] sm:$0xff] %v539
      %796 = vst [vmem:[%s151 + $0x408] sm:$0xff] %v540
      %797 = vst [vmem:[%s151 + $0x410] sm:$0xff] %v541
      %798 = vst [vmem:[%s151 + $0x418] sm:$0xff] %v542
      %799 = vst [vmem:[%s151 + $0x420] sm:$0xff] %v543
      %800 = vst [vmem:[%s151 + $0x428] sm:$0xff] %v544
      %801 = vst [vmem:[%s151 + $0x430] sm:$0xff] %v545
      %802 = vst [vmem:[%s151 + $0x438] sm:$0xff] %v546
      %803 = vst [vmem:[%s151 + $0x440] sm:$0xff] %v547
      %804 = vst [vmem:[%s151 + $0x448] sm:$0xff] %v548
      %805 = vst [vmem:[%s151 + $0x450] sm:$0xff] %v549
      %806 = vst [vmem:[%s151 + $0x458] sm:$0xff] %v550
      %807 = vst [vmem:[%s151 + $0x460] sm:$0xff] %v551
      %808 = vst [vmem:[%s151 + $0x468] sm:$0xff] %v552
      %809 = vst [vmem:[%s151 + $0x470] sm:$0xff] %v553
      %810 = vst [vmem:[%s151 + $0x478] sm:$0xff] %v554
      %811 = vst [vmem:[%s151 + $0x480] sm:$0xff] %v555
      %812 = vst [vmem:[%s151 + $0x488] sm:$0xff] %v556
      %813 = vst [vmem:[%s151 + $0x490] sm:$0xff] %v557
      %814 = vst [vmem:[%s151 + $0x498] sm:$0xff] %v558
      %815 = vst [vmem:[%s151 + $0x4a0] sm:$0xff] %v559
      %816 = vst [vmem:[%s151 + $0x4a8] sm:$0xff] %v560
      %817 = vst [vmem:[%s151 + $0x4b0] sm:$0xff] %v561
      %818 = vst [vmem:[%s151 + $0x4b8] sm:$0xff] %v562
      %819 = vst [vmem:[%s151 + $0x4c0] sm:$0xff] %v563
      %820 = vst [vmem:[%s151 + $0x4c8] sm:$0xff] %v564
      %821 = vst [vmem:[%s151 + $0x4d0] sm:$0xff] %v565
      %822 = vst [vmem:[%s151 + $0x4d8] sm:$0xff] %v566
      %823 = vst [vmem:[%s151 + $0x4e0] sm:$0xff] %v567
      %824 = vst [vmem:[%s151 + $0x4e8] sm:$0xff] %v568
      %825 = vst [vmem:[%s151 + $0x4f0] sm:$0xff] %v569
      %826 = vst [vmem:[%s151 + $0x4f8] sm:$0xff] %v570
      %827 = vst [vmem:[%s151 + $0x500] sm:$0xff] %v571
      %828 = vst [vmem:[%s151 + $0x508] sm:$0xff] %v572
      %829 = vst [vmem:[%s151 + $0x510] sm:$0xff] %v573
      %830 = vst [vmem:[%s151 + $0x518] sm:$0xff] %v574
      %831 = vst [vmem:[%s151 + $0x520] sm:$0xff] %v575
      %832 = vst [vmem:[%s151 + $0x528] sm:$0xff] %v576
      %833 = vst [vmem:[%s151 + $0x530] sm:$0xff] %v577
      %834 = vst [vmem:[%s151 + $0x538] sm:$0xff] %v578
      %835 = vst [vmem:[%s151 + $0x540] sm:$0xff] %v579
      %836 = vst [vmem:[%s151 + $0x548] sm:$0xff] %v580
      %837 = vst [vmem:[%s151 + $0x550] sm:$0xff] %v581
      %838 = vst [vmem:[%s151 + $0x558] sm:$0xff] %v582
      %839 = vst [vmem:[%s151 + $0x560] sm:$0xff] %v583
      %840 = vst [vmem:[%s151 + $0x568] sm:$0xff] %v584
      %841 = vst [vmem:[%s151 + $0x570] sm:$0xff] %v585
      %842 = vst [vmem:[%s151 + $0x578] sm:$0xff] %v586
      %843 = vst [vmem:[%s151 + $0x580] sm:$0xff] %v587
      %844 = vst [vmem:[%s151 + $0x588] sm:$0xff] %v588
      %845 = vst [vmem:[%s151 + $0x590] sm:$0xff] %v589
      %846 = vst [vmem:[%s151 + $0x598] sm:$0xff] %v590
      %847 = vst [vmem:[%s151 + $0x5a0] sm:$0xff] %v591
      %848 = vst [vmem:[%s151 + $0x5a8] sm:$0xff] %v592
      %849 = vst [vmem:[%s151 + $0x5b0] sm:$0xff] %v593
      %850 = vst [vmem:[%s151 + $0x5b8] sm:$0xff] %v594
      %851 = vst [vmem:[%s151 + $0x5c0] sm:$0xff] %v595
      %852 = vst [vmem:[%s151 + $0x5c8] sm:$0xff] %v596
      %853 = vst [vmem:[%s151 + $0x5d0] sm:$0xff] %v597
      %854 = vst [vmem:[%s151 + $0x5d8] sm:$0xff] %v598
      %855 = vst [vmem:[%s151 + $0x5e0] sm:$0xff] %v599
      %856 = vst [vmem:[%s151 + $0x5e8] sm:$0xff] %v600
      %857 = vst [vmem:[%s151 + $0x5f0] sm:$0xff] %v601
      %858 = vst [vmem:[%s151 + $0x5f8] sm:$0xff] %v602
      %859 = vst [vmem:[%s151 + $0x600] sm:$0xff] %v603
      %860 = vst [vmem:[%s151 + $0x608] sm:$0xff] %v604
      %861 = vst [vmem:[%s151 + $0x610] sm:$0xff] %v605
      %862 = vst [vmem:[%s151 + $0x618] sm:$0xff] %v606
      %863 = vst [vmem:[%s151 + $0x620] sm:$0xff] %v607
      %864 = vst [vmem:[%s151 + $0x628] sm:$0xff] %v608
      %865 = vst [vmem:[%s151 + $0x630] sm:$0xff] %v609
      %866 = vst [vmem:[%s151 + $0x638] sm:$0xff] %v610
      %867 = vst [vmem:[%s151 + $0x640] sm:$0xff] %v611
      %868 = vst [vmem:[%s151 + $0x648] sm:$0xff] %v612
      %869 = vst [vmem:[%s151 + $0x650] sm:$0xff] %v613
      %870 = vst [vmem:[%s151 + $0x658] sm:$0xff] %v614
      %871 = vst [vmem:[%s151 + $0x660] sm:$0xff] %v615
      %872 = vst [vmem:[%s151 + $0x668] sm:$0xff] %v616
      %873 = vst [vmem:[%s151 + $0x670] sm:$0xff] %v617
      %874 = vst [vmem:[%s151 + $0x678] sm:$0xff] %v618
      %875 = vst [vmem:[%s151 + $0x680] sm:$0xff] %v619
      %876 = vst [vmem:[%s151 + $0x688] sm:$0xff] %v620
      %877 = vst [vmem:[%s151 + $0x690] sm:$0xff] %v621
      %878 = vst [vmem:[%s151 + $0x698] sm:$0xff] %v622
      %879 = vst [vmem:[%s151 + $0x6a0] sm:$0xff] %v623
      %880 = vst [vmem:[%s151 + $0x6a8] sm:$0xff] %v624
      %881 = vst [vmem:[%s151 + $0x6b0] sm:$0xff] %v625
      %882 = vst [vmem:[%s151 + $0x6b8] sm:$0xff] %v626
      %883 = vst [vmem:[%s151 + $0x6c0] sm:$0xff] %v627
      %884 = vst [vmem:[%s151 + $0x6c8] sm:$0xff] %v628
      %885 = vst [vmem:[%s151 + $0x6d0] sm:$0xff] %v629
      %886 = vst [vmem:[%s151 + $0x6d8] sm:$0xff] %v630
      %887 = vst [vmem:[%s151 + $0x6e0] sm:$0xff] %v631
      %888 = vst [vmem:[%s151 + $0x6e8] sm:$0xff] %v632
      %889 = vst [vmem:[%s151 + $0x6f0] sm:$0xff] %v633
      %890 = vst [vmem:[%s151 + $0x6f8] sm:$0xff] %v634
      %891 = vst [vmem:[%s151 + $0x700] sm:$0xff] %v635
      %892 = vst [vmem:[%s151 + $0x708] sm:$0xff] %v636
      %893 = vst [vmem:[%s151 + $0x710] sm:$0xff] %v637
      %894 = vst [vmem:[%s151 + $0x718] sm:$0xff] %v638
      %895 = vst [vmem:[%s151 + $0x720] sm:$0xff] %v639
      %896 = vst [vmem:[%s151 + $0x728] sm:$0xff] %v640
      %897 = vst [vmem:[%s151 + $0x730] sm:$0xff] %v641
      %898 = vst [vmem:[%s151 + $0x738] sm:$0xff] %v642
      %899 = vst [vmem:[%s151 + $0x740] sm:$0xff] %v643
      %900 = vst [vmem:[%s151 + $0x748] sm:$0xff] %v644
      %901 = vst [vmem:[%s151 + $0x750] sm:$0xff] %v645
      %902 = vst [vmem:[%s151 + $0x758] sm:$0xff] %v646
      %903 = vst [vmem:[%s151 + $0x760] sm:$0xff] %v647
      %904 = vst [vmem:[%s151 + $0x768] sm:$0xff] %v648
      %905 = vst [vmem:[%s151 + $0x770] sm:$0xff] %v649
      %906 = vst [vmem:[%s151 + $0x778] sm:$0xff] %v650
      %907 = vst [vmem:[%s151 + $0x780] sm:$0xff] %v651
      %908 = vst [vmem:[%s151 + $0x788] sm:$0xff] %v652
      %909 = vst [vmem:[%s151 + $0x790] sm:$0xff] %v653
      %910 = vst [vmem:[%s151 + $0x798] sm:$0xff] %v654
      %911 = vst [vmem:[%s151 + $0x7a0] sm:$0xff] %v655
      %912 = vst [vmem:[%s151 + $0x7a8] sm:$0xff] %v656
      %913 = vst [vmem:[%s151 + $0x7b0] sm:$0xff] %v657
      %914 = vst [vmem:[%s151 + $0x7b8] sm:$0xff] %v658
      %915 = vst [vmem:[%s151 + $0x7c0] sm:$0xff] %v659
      %916 = vst [vmem:[%s151 + $0x7c8] sm:$0xff] %v660
      %917 = vst [vmem:[%s151 + $0x7d0] sm:$0xff] %v661
      %918 = vst [vmem:[%s151 + $0x7d8] sm:$0xff] %v662
      %919 = vst [vmem:[%s151 + $0x7e0] sm:$0xff] %v663
      %920 = vst [vmem:[%s151 + $0x7e8] sm:$0xff] %v664
      %921 = vst [vmem:[%s151 + $0x7f0] sm:$0xff] %v665
      %922 = vst [vmem:[%s151 + $0x7f8] sm:$0xff] %v666
      %s923 = smul.u32 64, %s14
      %p924 = scmp.lt.s32.totalorder %s923, 255
      %s925 = scalar_select %p924, %s923, 255
      %s926 = smul.addr %s925, 4
      %s927 = smul.addr %s926, 8
      %s928 = scalar_lea.vmem %s2, %s927
      // Predicated region
      $region29: #{_shift_large.1} parent=27 // pred_check
        %p929 = pneg %p79
      $region30: #{_shift_large.1} parent=27 // pred_check_branch
        %931 = sbr.rel (%p929) target = $region32
      $region31: #{_shift_large.1} parent=27 // pred_region
        %s932 = smul.u32 64, %s14
      $region32: #{_shift_large.1} parent=27 // pred_fallthru
        _
    $region28: #{_shift_large.1} parent=5 // pred_fallthru
      _
    %p933 = scmp.le.s32.totalorder 2, %s9
    // Predicated region
    $region33: #{_shift_large.1} parent=5 // pred_check
      %p934 = pneg %p933
    $region34: #{_shift_large.1} parent=5 // pred_check_branch
      %936 = sbr.rel (%p934) target = $region36
    $region35: #{_shift_large.1} parent=5 // pred_region
      %s937 = ssub.s32 %s9, 2
      // Predicated region
      $region37: #{_shift_large.1} parent=35 // pred_check
        %p938 = pneg %p85
      $region38: #{_shift_large.1} parent=35 // pred_check_branch
        %940 = sbr.rel (%p938) target = $region40
      $region39: #{_shift_large.1} parent=35 // pred_region
        %s941 = smul.u32 64, %s15
        %p942 = scmp.lt.s32.totalorder %s941, 255
        %s943 = scalar_select %p942, %s941, 255
        %s944 = smul.addr %s943, 4
        %s945 = smul.addr %s944, 8
        %s946 = scalar_lea.vmem %s2, %s945
      $region40: #{_shift_large.1} parent=35 // pred_fallthru
        _
    $region36: #{_shift_large.1} parent=5 // pred_fallthru
      _
  $region6: #{_shift_large.1} parent=0 // loop_footer
    %s13 = sadd.s32 1, %s9
  $region7: #{_shift_large.1} parent=0 // loop_footer_branch
    %8 = sbr.rel target = $region3
  $region8: #{_shift_large.1} parent=0 // loop_exit
    _

</llo_original>
